<compile_context>
chip_gen: v5e
topology: v5e:2x2
jax: 0.10.0
libtpu: 0.0.40
codegen_flags: <defaults>
</compile_context>

<pallas_src>
import numpy as np

import jax
import jax.numpy as jnp
from jax.experimental import pallas as pl
from jax.experimental.pallas import tpu as pltpu

D_IN, D_H1, D_H2, D_OUT = 3, 16, 32, 92 - 20  # 92 - 20 = 72


def pnet_kernel(x_ref, w1_ref, b1_ref, w2_ref, b2_ref, w3_ref, b3_ref, o_ref):
    # ---- Layer 1 (K=3) on the VPU: three broadcast FMAs, f32, exact. ----
    x = x_ref[...]                                   # (TB, 3)  f32
    w1 = w1_ref[...]                                 # (3, 16)  f32
    h1 = (x[:, 0:1] * w1[0:1, :]
          + x[:, 1:2] * w1[1:2, :]
          + x[:, 2:3] * w1[2:3, :]
          + b1_ref[...])
    h1 = jnp.maximum(h1, 0.0)                        # (TB, 16) f32

    # ---- Layers 2/3 on the MXU (bf16 inputs by default, f32 accumulate). ----
    cdt = w2_ref.dtype                               # bf16 (fast) or f32 (exact)
    h2 = jnp.dot(h1.astype(cdt), w2_ref[...],
                 preferred_element_type=jnp.float32)
    h2 = jnp.maximum(h2 + b2_ref[...], 0.0)          # (TB, 32) f32
    out = jnp.dot(h2.astype(cdt), w3_ref[...],
                  preferred_element_type=jnp.float32)
    out = out + b3_ref[...]                          # (TB, 72) f32
    o_ref[...] = out.astype(o_ref.dtype)


def _vmem_capacity_bytes():
    try:
        return int(pltpu.get_tpu_info().vmem_capacity_bytes)
    except Exception:
        return 64 << 20  # conservative (v7x-sized) fallback


def pnet_forward(x, params, *, tb=None, exact=False, out_dtype=jnp.float32):
    """Fused PNet forward.

    tb:        batch tile size (rows).  Default is generation-aware: 8192 on
               128 MiB-VMEM parts (v5e/v6e), 2048 on v7x.  Always capped at
               ceil(B/2) so the parallel grid has >= 2 steps when possible.
    exact:     True -> full-f32 matmuls (bit-level PyTorch parity path).
               False (default) -> bf16 MXU inputs, f32 accumulation.
    out_dtype: output dtype; bf16 halves the dominant output writeback.
    """
    w1, b1, w2, b2, w3, b3 = params
    B = x.shape[0]

    vmem_cap = _vmem_capacity_bytes()
    big_vmem = vmem_cap >= (100 << 20)          # v5e/v6e (128 MiB) vs v7x (64 MiB)
    if tb is None:
        tb = 8192 if big_vmem else 2048

    # Cap tile so we get >= 2 grid steps when the batch allows it (v7x
    # megacore), and round to 8-sublane multiples.
    half = max(8, ((pl.cdiv(B, 2) + 7) // 8) * 8)
    tb = max(8, min(int(tb), half))
    num_tiles = pl.cdiv(B, tb)
    b_pad = num_tiles * tb
    if b_pad != B:
        # Pad ragged batch; padded rows are computed and sliced off below.
        x = jnp.pad(x, ((0, b_pad - B), (0, 0)))

    if not exact:
        # Pre-cast the MXU weights once in the wrapper (no per-step cast,
        # half the resident VMEM).  w1 stays f32 (used on the VPU); biases
        # stay f32 (added in the f32 epilogue).
        w2 = w2.astype(jnp.bfloat16)
        w3 = w3.astype(jnp.bfloat16)

    # Weights/biases: constant block index -> resident in VMEM across the grid.
    resident = lambda arr: pl.BlockSpec(arr.shape, lambda i: (0, 0))
    # NOTE: pipeline_mode=pl.Buffered(1) on resident specs would save a few KiB
    # of VMEM but is skipped here to keep lowering maximally portable.

    out_bytes = np.dtype(out_dtype).itemsize
    flops = 2 * b_pad * (D_IN * D_H1 + D_H1 * D_H2 + D_H2 * D_OUT)
    bytes_accessed = (b_pad * (128 * 4 + 128 * out_bytes)   # lane-padded x / out rows
                      + sum(int(np.prod(p.shape)) * np.dtype(p.dtype).itemsize
                            for p in (w1, b1, w2, b2, w3, b3)))

    # Headroom below physical VMEM on v7x; generous on 128 MiB parts.
    vmem_limit = (64 << 20) if big_vmem else (32 << 20)

    out = pl.pallas_call(
        pnet_kernel,
        out_shape=jax.ShapeDtypeStruct((b_pad, D_OUT), out_dtype),
        grid=(num_tiles,),
        in_specs=[
            pl.BlockSpec((tb, D_IN), lambda i: (i, 0)),      # x: batch-tiled
            resident(w1), resident(b1),
            resident(w2), resident(b2),
            resident(w3), resident(b3),
        ],
        out_specs=pl.BlockSpec((tb, D_OUT), lambda i: (i, 0)),
        compiler_params=pltpu.CompilerParams(
            dimension_semantics=("parallel",),               # megacore on v7x
            vmem_limit_bytes=vmem_limit,
        ),
        cost_estimate=pl.CostEstimate(
            flops=flops, transcendentals=0, bytes_accessed=bytes_accessed),
    )(x, w1, b1, w2, b2, w3, b3)

    if b_pad != B:
        out = out[:B]
    return out


def init_pnet_params(key):
    """Deterministic init mimicking PyTorch nn.Linear (U(-1/sqrt(fan_in), +))."""
    dims = [(D_IN, D_H1), (D_H1, D_H2), (D_H2, D_OUT)]
    params = []
    for fan_in, fan_out in dims:
        kw, kb, key = jax.random.split(key, 3)
        bound = 1.0 / np.sqrt(fan_in)
        w = jax.random.uniform(kw, (fan_in, fan_out), jnp.float32, -bound, bound)
        b = jax.random.uniform(kb, (1, fan_out), jnp.float32, -bound, bound)
        params.extend([w, b])
    return tuple(params)


def pnet_reference(x, params):
    w1, b1, w2, b2, w3, b3 = params
    h1 = jnp.maximum(x @ w1 + b1, 0.0)
    h2 = jnp.maximum(h1 @ w2 + b2, 0.0)
    return h2 @ w3 + b3


if __name__ == "__main__":
    key = jax.random.PRNGKey(0)
    kx, kx2, kp = jax.random.split(key, 3)
    params = init_pnet_params(kp)

    # Small batch (single-tile path).
    x_small = jax.random.normal(kx, (8, D_IN), dtype=jnp.float32)
    ref_small = pnet_reference(x_small, params)

    # Default fast path: bf16 MXU inputs, f32 accumulation.
    out_fast = jax.block_until_ready(pnet_forward(x_small, params))
    np.testing.assert_allclose(np.asarray(out_fast), np.asarray(ref_small),
                               rtol=2e-2, atol=2e-2)

    # Exact-parity path: full f32.
    out_exact = jax.block_until_ready(pnet_forward(x_small, params, exact=True))
    np.testing.assert_allclose(np.asarray(out_exact), np.asarray(ref_small),
                               rtol=1e-5, atol=1e-5)

    # Ragged batch exercising the multi-tile / padding path.
    x_big = jax.random.normal(kx2, (300, D_IN), dtype=jnp.float32)
    ref_big = pnet_reference(x_big, params)
    out_big = jax.block_until_ready(pnet_forward(x_big, params, tb=128))
    np.testing.assert_allclose(np.asarray(out_big), np.asarray(ref_big),
                               rtol=2e-2, atol=2e-2)

    # Optional bf16 output (halves the dominant 288 B/row writeback).
    out_bf16 = jax.block_until_ready(
        pnet_forward(x_big, params, tb=128, out_dtype=jnp.bfloat16))
    np.testing.assert_allclose(np.asarray(out_bf16.astype(jnp.float32)),
                               np.asarray(ref_big), rtol=5e-2, atol=5e-2)

    print("KERNEL_OK")
</pallas_src>

<mosaic_0001>
module attributes {stable_mosaic.version = 11 : i64} {
  func.func @pnet_kernel(%arg0: i32, %arg1: memref<8x3xf32, #tpu.memory_space<vmem>>, %arg2: memref<3x16xf32, #tpu.memory_space<vmem>>, %arg3: memref<1x16xf32, #tpu.memory_space<vmem>>, %arg4: memref<16x32xbf16, #tpu.memory_space<vmem>>, %arg5: memref<1x32xf32, #tpu.memory_space<vmem>>, %arg6: memref<32x72xbf16, #tpu.memory_space<vmem>>, %arg7: memref<1x72xf32, #tpu.memory_space<vmem>>, %arg8: memref<8x72xf32, #tpu.memory_space<vmem>>) attributes {dimension_semantics = [#tpu.dimension_semantics<parallel>], iteration_bounds = array<i64: 1>, scalar_prefetch = 0 : i64, scratch_operands = 0 : i64, tpu.core_type = #tpu.core_type<tc>, window_params = [{transform_indices = @transform_0, window_bounds = array<i64: 8, 3>}, {pipeline_mode = #tpu.pipeline_mode<synchronous>, transform_indices = @transform_1, window_bounds = array<i64: 3, 16>}, {pipeline_mode = #tpu.pipeline_mode<synchronous>, transform_indices = @transform_2, window_bounds = array<i64: 1, 16>}, {pipeline_mode = #tpu.pipeline_mode<synchronous>, transform_indices = @transform_3, window_bounds = array<i64: 16, 32>}, {pipeline_mode = #tpu.pipeline_mode<synchronous>, transform_indices = @transform_4, window_bounds = array<i64: 1, 32>}, {pipeline_mode = #tpu.pipeline_mode<synchronous>, transform_indices = @transform_5, window_bounds = array<i64: 32, 72>}, {pipeline_mode = #tpu.pipeline_mode<synchronous>, transform_indices = @transform_6, window_bounds = array<i64: 1, 72>}, {transform_indices = @transform_7, window_bounds = array<i64: 8, 72>}]} {
    %c0 = arith.constant 0 : index
    %c0_0 = arith.constant 0 : index
    %0 = vector.load %arg1[%c0, %c0_0] : memref<8x3xf32, #tpu.memory_space<vmem>>, vector<8x3xf32>
    %c0_1 = arith.constant 0 : index
    %c0_2 = arith.constant 0 : index
    %1 = vector.load %arg2[%c0_1, %c0_2] : memref<3x16xf32, #tpu.memory_space<vmem>>, vector<3x16xf32>
    %2 = vector.extract_strided_slice %0 {offsets = [0, 0], sizes = [8, 1], strides = [1, 1]} : vector<8x3xf32> to vector<8x1xf32>
    %3 = vector.extract_strided_slice %1 {offsets = [0, 0], sizes = [1, 16], strides = [1, 1]} : vector<3x16xf32> to vector<1x16xf32>
    %4 = vector.broadcast %2 : vector<8x1xf32> to vector<8x16xf32>
    %5 = vector.broadcast %3 : vector<1x16xf32> to vector<8x16xf32>
    %6 = arith.mulf %4, %5 : vector<8x16xf32>
    %7 = vector.extract_strided_slice %0 {offsets = [0, 1], sizes = [8, 1], strides = [1, 1]} : vector<8x3xf32> to vector<8x1xf32>
    %8 = vector.extract_strided_slice %1 {offsets = [1, 0], sizes = [1, 16], strides = [1, 1]} : vector<3x16xf32> to vector<1x16xf32>
    %9 = vector.broadcast %7 : vector<8x1xf32> to vector<8x16xf32>
    %10 = vector.broadcast %8 : vector<1x16xf32> to vector<8x16xf32>
    %11 = arith.mulf %9, %10 : vector<8x16xf32>
    %12 = arith.addf %6, %11 : vector<8x16xf32>
    %13 = vector.extract_strided_slice %0 {offsets = [0, 2], sizes = [8, 1], strides = [1, 1]} : vector<8x3xf32> to vector<8x1xf32>
    %14 = vector.extract_strided_slice %1 {offsets = [2, 0], sizes = [1, 16], strides = [1, 1]} : vector<3x16xf32> to vector<1x16xf32>
    %15 = vector.broadcast %13 : vector<8x1xf32> to vector<8x16xf32>
    %16 = vector.broadcast %14 : vector<1x16xf32> to vector<8x16xf32>
    %17 = arith.mulf %15, %16 : vector<8x16xf32>
    %18 = arith.addf %12, %17 : vector<8x16xf32>
    %c0_3 = arith.constant 0 : index
    %c0_4 = arith.constant 0 : index
    %19 = vector.load %arg3[%c0_3, %c0_4] : memref<1x16xf32, #tpu.memory_space<vmem>>, vector<1x16xf32>
    %20 = vector.broadcast %19 : vector<1x16xf32> to vector<8x16xf32>
    %21 = arith.addf %18, %20 : vector<8x16xf32>
    %cst = arith.constant 0.000000e+00 : f32
    %22 = vector.broadcast %cst : f32 to vector<8x16xf32>
    %23 = arith.maximumf %21, %22 : vector<8x16xf32>
    %24 = arith.truncf %23 : vector<8x16xf32> to vector<8x16xbf16>
    %c0_5 = arith.constant 0 : index
    %c0_6 = arith.constant 0 : index
    %25 = vector.load %arg4[%c0_5, %c0_6] : memref<16x32xbf16, #tpu.memory_space<vmem>>, vector<16x32xbf16>
    %cst_7 = arith.constant dense<0.000000e+00> : vector<8x32xf32>
    %26 = tpu.matmul %24, %25, %cst_7 {dimension_numbers = #tpu.dot_dimension_numbers<[1], [0], [0], [1], [0, 0, 1, 1], [], []>} : vector<8x16xbf16>, vector<16x32xbf16>, vector<8x32xf32> -> vector<8x32xf32>
    %c0_8 = arith.constant 0 : index
    %c0_9 = arith.constant 0 : index
    %27 = vector.load %arg5[%c0_8, %c0_9] : memref<1x32xf32, #tpu.memory_space<vmem>>, vector<1x32xf32>
    %28 = vector.broadcast %27 : vector<1x32xf32> to vector<8x32xf32>
    %29 = arith.addf %26, %28 : vector<8x32xf32>
    %cst_10 = arith.constant 0.000000e+00 : f32
    %30 = vector.broadcast %cst_10 : f32 to vector<8x32xf32>
    %31 = arith.maximumf %29, %30 : vector<8x32xf32>
    %32 = arith.truncf %31 : vector<8x32xf32> to vector<8x32xbf16>
    %c0_11 = arith.constant 0 : index
    %c0_12 = arith.constant 0 : index
    %33 = vector.load %arg6[%c0_11, %c0_12] : memref<32x72xbf16, #tpu.memory_space<vmem>>, vector<32x72xbf16>
    %cst_13 = arith.constant dense<0.000000e+00> : vector<8x72xf32>
    %34 = tpu.matmul %32, %33, %cst_13 {dimension_numbers = #tpu.dot_dimension_numbers<[1], [0], [0], [1], [0, 0, 1, 1], [], []>} : vector<8x32xbf16>, vector<32x72xbf16>, vector<8x72xf32> -> vector<8x72xf32>
    %c0_14 = arith.constant 0 : index
    %c0_15 = arith.constant 0 : index
    %35 = vector.load %arg7[%c0_14, %c0_15] : memref<1x72xf32, #tpu.memory_space<vmem>>, vector<1x72xf32>
    %36 = vector.broadcast %35 : vector<1x72xf32> to vector<8x72xf32>
    %37 = arith.addf %34, %36 : vector<8x72xf32>
    %c0_16 = arith.constant 0 : index
    %c0_17 = arith.constant 0 : index
    %38 = vector.load %arg8[%c0_16, %c0_17] : memref<8x72xf32, #tpu.memory_space<vmem>>, vector<8x72xf32>
    tpu.vector_store %arg8[%c0_16, %c0_17], %37 {strides = array<i32>} : memref<8x72xf32, #tpu.memory_space<vmem>>, vector<8x72xf32>,
    return
  }
  func.func @transform_0(%arg0: i32) -> (i32, i32) {
    %c0_i32 = arith.constant 0 : i32
    %c0_i32_0 = arith.constant 0 : i32
    return %arg0, %c0_i32 : i32, i32
  }
  func.func @transform_1(%arg0: i32) -> (i32, i32) {
    %c0_i32 = arith.constant 0 : i32
    %c0_i32_0 = arith.constant 0 : i32
    %c0_i32_1 = arith.constant 0 : i32
    return %c0_i32, %c0_i32_0 : i32, i32
  }
  func.func @transform_2(%arg0: i32) -> (i32, i32) {
    %c0_i32 = arith.constant 0 : i32
    %c0_i32_0 = arith.constant 0 : i32
    %c0_i32_1 = arith.constant 0 : i32
    return %c0_i32, %c0_i32_0 : i32, i32
  }
  func.func @transform_3(%arg0: i32) -> (i32, i32) {
    %c0_i32 = arith.constant 0 : i32
    %c0_i32_0 = arith.constant 0 : i32
    %c0_i32_1 = arith.constant 0 : i32
    return %c0_i32, %c0_i32_0 : i32, i32
  }
  func.func @transform_4(%arg0: i32) -> (i32, i32) {
    %c0_i32 = arith.constant 0 : i32
    %c0_i32_0 = arith.constant 0 : i32
    %c0_i32_1 = arith.constant 0 : i32
    return %c0_i32, %c0_i32_0 : i32, i32
  }
  func.func @transform_5(%arg0: i32) -> (i32, i32) {
    %c0_i32 = arith.constant 0 : i32
    %c0_i32_0 = arith.constant 0 : i32
    %c0_i32_1 = arith.constant 0 : i32
    return %c0_i32, %c0_i32_0 : i32, i32
  }
  func.func @transform_6(%arg0: i32) -> (i32, i32) {
    %c0_i32 = arith.constant 0 : i32
    %c0_i32_0 = arith.constant 0 : i32
    %c0_i32_1 = arith.constant 0 : i32
    return %c0_i32, %c0_i32_0 : i32, i32
  }
  func.func @transform_7(%arg0: i32) -> (i32, i32) {
    %c0_i32 = arith.constant 0 : i32
    %c0_i32_0 = arith.constant 0 : i32
    return %arg0, %c0_i32 : i32, i32
  }
}

</mosaic_0001>

<llo_original>
// kernel: tpu_custom_call.1
$region0: #{tpu_custom_call.1}
  #allocation0 [shape = 'u32[]', space=smem, size = 0x4, offset = 0x4, fixed_abs, tag = 'smem constant byte address 0x4 - core index']
  #allocation1 [shape = 'u32[72,128]{1,0:T(1,128)}', space=vmem, size = 0x9000, scoped, tag = 'internal scratch']
  %s0 = inlined_call_operand.vmem [shape: f32[8,3], index: 0, kind: input, shape index: {}]
  %s1 = inlined_call_operand.hbm [shape: f32[3,16], index: 1, kind: input, shape index: {}]
  %s2 = inlined_call_operand.hbm [shape: f32[1,16], index: 2, kind: input, shape index: {}]
  %s3 = inlined_call_operand.hbm [shape: bf16[16,32], index: 3, kind: input, shape index: {}]
  %s4 = inlined_call_operand.hbm [shape: f32[1,32], index: 4, kind: input, shape index: {}]
  %s5 = inlined_call_operand.vmem [shape: bf16[32,72], index: 5, kind: input, shape index: {}]
  %s6 = inlined_call_operand.vmem [shape: f32[1,72], index: 6, kind: input, shape index: {}]
  %s7 = inlined_call_operand.hbm [shape: f32[8,72], index: 7, kind: output, shape index: {}]
  %s8 = sld [smem:[#allocation0]]
  $region54: #{tpu_custom_call.1} parent=0
    _
  %s10 = ssub.s32 1, %s8
  %s11 = scalar_select 0, %s10, %s8
  $region1: #{tpu_custom_call.1} parent=0
    #allocation2 [shape = 'u8[2048]{0}', space=vmem, size = 0x800, scoped, tag = 'input window, operand 1, single buffered']
    #allocation3 [shape = 's32[1]{0}', space=sflag, size = 0x4, scoped, tag = 'scoped memory for tpu_custom_call.1']
    #allocation4 [shape = 's32[1]{0}', space=sflag, size = 0x4, scoped, tag = 'scoped memory for tpu_custom_call.1']
    #allocation5 [shape = 'u8[512]{0}', space=vmem, size = 0x400, scoped, tag = 'input window, operand 2, single buffered']
    #allocation6 [shape = 's32[1]{0}', space=sflag, size = 0x4, scoped, tag = 'scoped memory for tpu_custom_call.1']
    #allocation7 [shape = 'u8[4096]{0}', space=vmem, size = 0x1000, scoped, tag = 'input window, operand 3, single buffered']
    #allocation8 [shape = 'u8[512]{0}', space=vmem, size = 0x400, scoped, tag = 'input window, operand 4, single buffered']
    #allocation9 [shape = 's32[1]{0}', space=sflag, size = 0x4, scoped, tag = 'scoped memory for tpu_custom_call.1']
    #allocation10 [shape = 'u8[4096]{0}', space=vmem, size = 0x1000, scoped, tag = 'output window, operand 0, single buffered']
    %12 = vsyncpa [#allocation3], 0
    %13 = vsyncpa [#allocation6], 0
    %14 = vsyncpa [#allocation9], 0
    %15 = vsyncpa [#allocation4], 0
    // Predicated region
    $region2: #{tpu_custom_call.1} parent=1 // pred_check
      _
    $region3: #{tpu_custom_call.1} parent=1 // pred_check_branch
      %17 = sbr.rel (0) target = $region5
    $region4: #{tpu_custom_call.1} parent=1 // pred_region
      _
    $region5: #{tpu_custom_call.1} parent=1 // pred_fallthru
      _
    // Predicated region
    $region6: #{tpu_custom_call.1} parent=1 // pred_check
      _
    $region7: #{tpu_custom_call.1} parent=1 // pred_check_branch
      %19 = sbr.rel (0) target = $region9
    $region8: #{tpu_custom_call.1} parent=1 // pred_region
      %21 = vsyncadd [#allocation3], 0
      %s23 = sshll.u32 %s1, 4
      %s24 = int_to_ptr.hbm [resolvable:$true] %s23
      %s25 = sshll.u32 [#allocation2], 4
      %s26 = int_to_ptr.vmem [resolvable:$true] %s25
      %28 = dma.hbm_to_vmem [thread:$0]  %s24, 64, %s26, [#allocation3]
    $region9: #{tpu_custom_call.1} parent=1 // pred_fallthru
      _
    // Predicated region
    $region10: #{tpu_custom_call.1} parent=1 // pred_check
      _
    $region11: #{tpu_custom_call.1} parent=1 // pred_check_branch
      %30 = sbr.rel (0) target = $region13
    $region12: #{tpu_custom_call.1} parent=1 // pred_region
      %32 = vsyncadd [#allocation6], 0
      %s34 = sshll.u32 %s2, 4
      %s35 = int_to_ptr.hbm [resolvable:$true] %s34
      %s36 = sshll.u32 [#allocation5], 4
      %s37 = int_to_ptr.vmem [resolvable:$true] %s36
      %39 = dma.hbm_to_vmem [thread:$0]  %s35, 16, %s37, [#allocation6]
    $region13: #{tpu_custom_call.1} parent=1 // pred_fallthru
      _
    // Predicated region
    $region14: #{tpu_custom_call.1} parent=1 // pred_check
      _
    $region15: #{tpu_custom_call.1} parent=1 // pred_check_branch
      %41 = sbr.rel (0) target = $region17
    $region16: #{tpu_custom_call.1} parent=1 // pred_region
      %43 = vsyncadd [#allocation6], 0
      %s44 = sshll.u32 %s3, 4
      %s45 = int_to_ptr.hbm [resolvable:$true] %s44
      %s46 = sshll.u32 [#allocation7], 4
      %s47 = int_to_ptr.vmem [resolvable:$true] %s46
      %52 = dma.hbm_to_vmem [thread:$0]  %s45, 128, %s47, [#allocation6], 64, 64, 4
    $region17: #{tpu_custom_call.1} parent=1 // pred_fallthru
      _
    // Predicated region
    $region18: #{tpu_custom_call.1} parent=1 // pred_check
      _
    $region19: #{tpu_custom_call.1} parent=1 // pred_check_branch
      %54 = sbr.rel (0) target = $region21
    $region20: #{tpu_custom_call.1} parent=1 // pred_region
      %56 = vsyncadd [#allocation9], 0
      %s58 = sshll.u32 %s4, 4
      %s59 = int_to_ptr.hbm [resolvable:$true] %s58
      %s60 = sshll.u32 [#allocation8], 4
      %s61 = int_to_ptr.vmem [resolvable:$true] %s60
      %63 = dma.hbm_to_vmem [thread:$0]  %s59, 16, %s61, [#allocation9]
    $region21: #{tpu_custom_call.1} parent=1 // pred_fallthru
      _
    // Predicated region
    $region22: #{tpu_custom_call.1} parent=1 // pred_check
      _
    $region23: #{tpu_custom_call.1} parent=1 // pred_check_branch
      %65 = sbr.rel (0) target = $region25
    $region24: #{tpu_custom_call.1} parent=1 // pred_region
      _
    $region25: #{tpu_custom_call.1} parent=1 // pred_fallthru
      _
    // Predicated region
    $region26: #{tpu_custom_call.1} parent=1 // pred_check
      _
    $region27: #{tpu_custom_call.1} parent=1 // pred_check_branch
      %67 = sbr.rel (0) target = $region29
    $region28: #{tpu_custom_call.1} parent=1 // pred_region
      _
    $region29: #{tpu_custom_call.1} parent=1 // pred_fallthru
      _
    // Predicated region
    $region30: #{tpu_custom_call.1} parent=1 // pred_check
      _
    $region31: #{tpu_custom_call.1} parent=1 // pred_check_branch
      %69 = sbr.rel (0) target = $region33
    $region32: #{tpu_custom_call.1} parent=1 // pred_region
      %71 = dma.done [#allocation3], 64
    $region33: #{tpu_custom_call.1} parent=1 // pred_fallthru
      _
    // Predicated region
    $region34: #{tpu_custom_call.1} parent=1 // pred_check
      _
    $region35: #{tpu_custom_call.1} parent=1 // pred_check_branch
      %73 = sbr.rel (0) target = $region37
    $region36: #{tpu_custom_call.1} parent=1 // pred_region
      %75 = dma.done [#allocation6], 16
    $region37: #{tpu_custom_call.1} parent=1 // pred_fallthru
      _
    // Predicated region
    $region38: #{tpu_custom_call.1} parent=1 // pred_check
      _
    $region39: #{tpu_custom_call.1} parent=1 // pred_check_branch
      %77 = sbr.rel (0) target = $region41
    $region40: #{tpu_custom_call.1} parent=1 // pred_region
      %79 = dma.done [#allocation6], 128
    $region41: #{tpu_custom_call.1} parent=1 // pred_fallthru
      _
    // Predicated region
    $region42: #{tpu_custom_call.1} parent=1 // pred_check
      _
    $region43: #{tpu_custom_call.1} parent=1 // pred_check_branch
      %81 = sbr.rel (0) target = $region45
    $region44: #{tpu_custom_call.1} parent=1 // pred_region
      %83 = dma.done [#allocation9], 16
    $region45: #{tpu_custom_call.1} parent=1 // pred_fallthru
      _
    %v85 = vld [vmem:[%s0] sm:$0xff]
    %v86 = vld [vmem:[#allocation2] sm:$0x7]
    %88 = vset.pattern.permute.xlu0 0
    %89 = vperm.xlu0 %88, %v85
    %v90 = vpop.permute.xlu0 %89
    %v92 = vperm.slane %v86, 0
    %v93 = vmul.f32 %v90, %v92
    %94 = vset.pattern.permute.xlu0 1
    %95 = vperm.xlu0 %94, %v85
    %v96 = vpop.permute.xlu0 %95
    %v98 = vperm.slane %v86, 1
    %v99 = vmul.f32 %v96, %v98
    %v100 = vadd.f32 %v93, %v99
    %101 = vset.pattern.permute.xlu0 2
    %102 = vperm.xlu0 %101, %v85
    %v103 = vpop.permute.xlu0 %102
    %v105 = vperm.slane %v86, 2
    %v106 = vmul.f32 %v103, %v105
    %v107 = vadd.f32 %v100, %v106
    %v108 = vld [vmem:[#allocation5] sm:$0x1]
    %v110 = vperm.slane %v108, 0
    %v112 = vadd.f32 %v107, %v110
    %v113 = vmax.f32 %v112, 0.0
    %v114 = vpack.c.bf16 %v113, %v113
    %v115 = vld [vmem:[#allocation7] sm:$0xf]
    %v116 = vld [vmem:[#allocation7 + $0x4] sm:$0xf]
    %v117 = vld [vmem:[#allocation8] sm:$0x1]
    %v119 = vperm.slane %v117, 0
    %v123 = vunpack.c.l.b16 %v115
    %v124 = vunpack.c.l.b16 %v116
    %v125 = vpack.c.b16 %v124, %v123
    %vm127 = vcmask 130048
    %v129 = vsel %vm127, %v114, 0
    %131 = vmatpush.bf16.msra.mxu0 0
    %132 = vmatpush.bf16.msra.mxu0 0
    %133 = vmatpush.bf16.msra.mxu0 0
    %134 = vmatpush.bf16.msra.mxu0 0
    %135 = vmatpush.bf16.msra.mxu0 0
    %136 = vmatpush.bf16.msra.mxu0 0
    %137 = vmatpush.bf16.msra.mxu0 0
    %138 = vmatpush.bf16.msra.mxu0 %v125
    %139 = vmatmul.bf16.gmra.mxu0 %v129
    %v140 = vpop.f32.mrf.mxu0
    %v141 = vadd.f32 %v119, %v140
    %v142 = vpop.f32.mrf.mxu0
    %143 = vdwg.mxu0
    %v144 = vmax.f32 %v141, 0.0
    %v145 = vpack.c.bf16 %v144, %v144
    %v146 = vld [vmem:[%s5] sm:$0xf]
    %v147 = vld [vmem:[%s5 + $0x4] sm:$0xf]
    %v148 = vld [vmem:[%s5 + $0x8] sm:$0xf]
    %v149 = vld [vmem:[%s5 + $0xc] sm:$0xf]
    %v150 = vld [vmem:[%s6] sm:$0x1]
    %v152 = vperm.slane %v150, 0
    %v158 = vunpack.c.l.b16 %v146
    %v159 = vunpack.c.l.b16 %v147
    %v160 = vunpack.c.l.b16 %v148
    %v161 = vunpack.c.l.b16 %v149
    %v162 = vpack.c.b16 %v159, %v158
    %v163 = vpack.c.b16 %v161, %v160
    %vm166 = vcmask 261120
    %v168 = vsel %vm166, %v145, 0
    %170 = vmatpush.bf16.msra.mxu0 0
    %171 = vmatpush.bf16.msra.mxu0 0
    %172 = vmatpush.bf16.msra.mxu0 0
    %173 = vmatpush.bf16.msra.mxu0 0
    %174 = vmatpush.bf16.msra.mxu0 0
    %175 = vmatpush.bf16.msra.mxu0 0
    %176 = vmatpush.bf16.msra.mxu0 %v163
    %177 = vmatpush.bf16.msra.mxu0 %v162
    %178 = vmatmul.bf16.gmra.mxu0 %v168
    %v179 = vpop.f32.mrf.mxu0
    %v180 = vadd.f32 %v152, %v179
    %v181 = vpop.f32.mrf.mxu0
    %182 = vdwg.mxu0
    %vm183 = vcmask 588800
    %184 = vst.msk [vmem:[#allocation10] sm:$0xff] %vm183, %v180
    // Predicated region
    $region46: #{tpu_custom_call.1} parent=1 // pred_check
      _
    $region47: #{tpu_custom_call.1} parent=1 // pred_check_branch
      %186 = sbr.rel (0) target = $region49
    $region48: #{tpu_custom_call.1} parent=1 // pred_region
      %188 = vsyncadd [#allocation4], 0
      %s190 = sshll.u32 [#allocation10], 4
      %s191 = int_to_ptr.vmem [resolvable:$true] %s190
      %s192 = sshll.u32 %s7, 4
      %s193 = int_to_ptr.hbm [resolvable:$true] %s192
      %195 = dma.vmem_to_hbm [thread:$0]  %s191, 128, %s193, [#allocation4]
    $region49: #{tpu_custom_call.1} parent=1 // pred_fallthru
      _
    // Predicated region
    $region50: #{tpu_custom_call.1} parent=1 // pred_check
      _
    $region51: #{tpu_custom_call.1} parent=1 // pred_check_branch
      %197 = sbr.rel (0) target = $region53
    $region52: #{tpu_custom_call.1} parent=1 // pred_region
      %199 = dma.done [#allocation4], 128
    $region53: #{tpu_custom_call.1} parent=1 // pred_fallthru
      _
    %200 = vsyncpa [#allocation3], 1
    %201 = vsyncpa [#allocation6], 1
    %202 = vsyncpa [#allocation9], 1
    %203 = vsyncpa [#allocation4], 1

</llo_original>
